<compile_context>
chip_gen: v7x
topology: tpu7x:2x2x1
jax: 0.10.0
libtpu: 0.0.40
codegen_flags: <defaults>
</compile_context>

<pallas_src>
from functools import partial

import jax
import jax.numpy as jnp
from jax.experimental import pallas as pl
from jax.experimental.pallas import tpu as pltpu


def _round_up(x, m):
    return (x + m - 1) // m * m


def rnn_kernel(x_ref, w_ih_ref, w_hh_ref, b_ref, w_fc_ref, b_fc_ref,
               out_ref, pre_ref):
    T, Bp, Ip = x_ref.shape
    Hp = w_hh_ref.shape[0]

    # (1) Bulk input projection for ALL timesteps in one MXU pass, with the
    #     (b_ih + b_hh) bias folded in here, OFF the serial recurrence path:
    #     pre[t] = x_t @ W_ih + b
    proj = jnp.dot(x_ref[...].reshape(T * Bp, Ip), w_ih_ref[...],
                   preferred_element_type=jnp.float32)
    pre_ref[...] = (proj + jnp.broadcast_to(b_ref[...], (T * Bp, Hp))
                    ).reshape(T, Bp, Hp)

    # (2) Loop-invariant loads hoisted out of the recurrence.
    w_hh = w_hh_ref[...]
    mm_dtype = w_hh.dtype

    # (3) Serial recurrence: per step the critical path is one (Bp,Hp)x(Hp,Hp)
    #     MXU matmul + one EUP tanh (bias already folded into pre).
    # TODO(synk): stage W_hh in MXU weight registers across the loop via
    # pltpu.matmul_push_rhs / matmul_acc_lhs / matmul_pop to drop the per-step
    # weight push from the serial h-dependency chain.
    def step(t, h):
        return jnp.tanh(
            pre_ref[t]
            + jnp.dot(h.astype(mm_dtype), w_hh,
                      preferred_element_type=jnp.float32))

    h_last = jax.lax.fori_loop(0, T, step,
                               jnp.zeros((Bp, Hp), jnp.float32),
                               unroll=min(T, 8))

    # (4) Final Linear on last hidden state; lane-dense unmasked store.
    out_ref[...] = (
        jnp.dot(h_last.astype(mm_dtype), w_fc_ref[...],
                preferred_element_type=jnp.float32)
        + jnp.broadcast_to(b_fc_ref[...], out_ref.shape))


@partial(jax.jit, static_argnames=("matmul_dtype",))
def simple_rnn_forward(x, w_ih, w_hh, b_ih, b_hh, w_fc, b_fc,
                       matmul_dtype=jnp.bfloat16):
    """x: (B, T, I) batch-first. Returns (B, O) float32.

    matmul_dtype: dtype of MXU operands (bf16 recommended on v5e/v6e/v7x);
    accumulation and the elementwise/tanh path are always f32.
    """
    B, T, I = x.shape
    H = w_hh.shape[0]
    O = w_fc.shape[0]
    if T < 1:
        raise ValueError("T must be >= 1 (nn.RNN last-timestep output).")

    mm = jnp.dtype(matmul_dtype)
    sub = 16 if mm.itemsize == 2 else 8          # sublane packing of mm dtype
    Bp = _round_up(B, sub)
    Ip = _round_up(I, 128)
    Hp = _round_up(H, 128)
    Op = _round_up(O, 128)

    f32 = jnp.float32
    # Single fused transpose + pad per array (all fused under this jit).
    x_p    = jnp.pad(jnp.transpose(x, (1, 0, 2)).astype(mm),
                     ((0, 0), (0, Bp - B), (0, Ip - I)))             # (T,Bp,Ip)
    w_ih_p = jnp.pad(jnp.transpose(w_ih).astype(mm), ((0, Ip - I), (0, Hp - H)))
    w_hh_p = jnp.pad(jnp.transpose(w_hh).astype(mm), ((0, Hp - H), (0, Hp - H)))
    w_fc_p = jnp.pad(jnp.transpose(w_fc).astype(mm), ((0, Hp - H), (0, Op - O)))
    b_p    = jnp.pad((b_ih + b_hh).astype(f32)[None, :], ((0, 0), (0, Hp - H)))
    b_fc_p = jnp.pad(b_fc.astype(f32)[None, :], ((0, 0), (0, Op - O)))

    # Constant-index blocks: single-buffered (index never changes).
    def const_spec(shape):
        nd = len(shape)

        def idx(i):
            return (0,) * nd

        return pl.BlockSpec(shape, idx, pipeline_mode=pl.Buffered(1))

    # VMEM actually used (blocks + scratch) with headroom; v5e's default scoped
    # limit is only 16 MiB, so set it explicitly.
    vmem_bytes = (
        T * Bp * Ip * mm.itemsize                        # x block (1 buffer)
        + (Ip * Hp + Hp * Hp + Hp * Op) * mm.itemsize    # weights (1 buffer each)
        + 8 * (Hp + Op) * 4                              # biases (sublane-padded)
        + 2 * Bp * Op * 4                                # out (double-buffered)
        + T * Bp * Hp * 4                                # pre-activation scratch
        + 4 * Bp * Hp * 4)                               # h carry + temporaries
    vmem_limit = int(min(128 * 1024 * 1024,
                         max(32 * 1024 * 1024, 2 * vmem_bytes)))

    # TODO(synk): at production sizes chunk T with an outer "arbitrary" grid
    # axis (carry h in a persistent VMEM scratch, init via pl.when) and add a
    # leading "parallel" batch-tile axis to feed v7x's second TensorCore.
    grid_spec = pltpu.PrefetchScalarGridSpec(
        num_scalar_prefetch=0,
        grid=(1,),                      # single invocation; T loop is in-kernel
        in_specs=[
            const_spec((T, Bp, Ip)),    # full x, resident
            const_spec((Ip, Hp)),
            const_spec((Hp, Hp)),
            const_spec((1, Hp)),
            const_spec((Hp, Op)),
            const_spec((1, Op)),
        ],
        out_specs=pl.BlockSpec((Bp, Op), lambda i: (0, 0)),
        scratch_shapes=[pltpu.VMEM((T, Bp, Hp), jnp.float32)],
    )

    out_p = pl.pallas_call(
        rnn_kernel,
        out_shape=jax.ShapeDtypeStruct((Bp, Op), f32),
        grid_spec=grid_spec,
        compiler_params=pltpu.CompilerParams(
            dimension_semantics=("arbitrary",),
            vmem_limit_bytes=vmem_limit),
    )(x_p, w_ih_p, w_hh_p, b_p, w_fc_p, b_fc_p)

    return out_p[:B, :O]


def reference_forward(x, w_ih, w_hh, b_ih, b_hh, w_fc, b_fc):
    B, T, I = x.shape
    H = w_hh.shape[0]
    h = jnp.zeros((B, H), jnp.float32)
    for t in range(T):
        h = jnp.tanh(x[:, t, :] @ w_ih.T + b_ih + h @ w_hh.T + b_hh)
    return h @ w_fc.T + b_fc


if __name__ == "__main__":
    # Small shapes consistent with the module's forward: x = (B, T, input_size)
    B, T, I, H, O = 2, 8, 16, 32, 4

    key = jax.random.PRNGKey(0)
    ks = jax.random.split(key, 7)
    scale = 1.0 / jnp.sqrt(H)

    x    = jax.random.normal(ks[0], (B, T, I), jnp.float32)
    w_ih = jax.random.uniform(ks[1], (H, I), jnp.float32, -scale, scale)
    w_hh = jax.random.uniform(ks[2], (H, H), jnp.float32, -scale, scale)
    b_ih = jax.random.uniform(ks[3], (H,),   jnp.float32, -scale, scale)
    b_hh = jax.random.uniform(ks[4], (H,),   jnp.float32, -scale, scale)
    w_fc = jax.random.uniform(ks[5], (O, H), jnp.float32, -scale, scale)
    b_fc = jax.random.uniform(ks[6], (O,),   jnp.float32, -scale, scale)

    ref = reference_forward(x, w_ih, w_hh, b_ih, b_hh, w_fc, b_fc)

    # f32 MXU operand path: exact semantics check against the reference.
    out_f32 = jax.block_until_ready(
        simple_rnn_forward(x, w_ih, w_hh, b_ih, b_hh, w_fc, b_fc,
                           matmul_dtype=jnp.float32))
    assert out_f32.shape == (B, O)
    assert jnp.allclose(out_f32, ref, atol=1e-5, rtol=1e-5), (
        f"f32 max abs err {jnp.max(jnp.abs(out_f32 - ref))}")

    # bf16 MXU operand path (f32 accumulation): the perf-default path.
    out_bf16 = jax.block_until_ready(
        simple_rnn_forward(x, w_ih, w_hh, b_ih, b_hh, w_fc, b_fc,
                           matmul_dtype=jnp.bfloat16))
    assert out_bf16.shape == (B, O)
    assert jnp.allclose(out_bf16, ref, atol=5e-2, rtol=5e-2), (
        f"bf16 max abs err {jnp.max(jnp.abs(out_bf16 - ref))}")

    print("KERNEL_OK")
</pallas_src>

<mosaic_0001>
module attributes {stable_mosaic.version = 11 : i64} {
  func.func @rnn_kernel(%arg0: i32, %arg1: memref<8x8x128xf32, #tpu.memory_space<vmem>>, %arg2: memref<128x128xf32, #tpu.memory_space<vmem>>, %arg3: memref<128x128xf32, #tpu.memory_space<vmem>>, %arg4: memref<1x128xf32, #tpu.memory_space<vmem>>, %arg5: memref<128x128xf32, #tpu.memory_space<vmem>>, %arg6: memref<1x128xf32, #tpu.memory_space<vmem>>, %arg7: memref<8x128xf32, #tpu.memory_space<vmem>>, %arg8: memref<8x8x128xf32, #tpu.memory_space<vmem>>) attributes {dimension_semantics = [#tpu.dimension_semantics<arbitrary>], iteration_bounds = array<i64: 1>, scalar_prefetch = 0 : i64, scratch_operands = 1 : i64, tpu.core_type = #tpu.core_type<tc>, window_params = [{pipeline_mode = #tpu.pipeline_mode<synchronous>, transform_indices = @transform_0, window_bounds = array<i64: 8, 8, 128>}, {pipeline_mode = #tpu.pipeline_mode<synchronous>, transform_indices = @transform_1, window_bounds = array<i64: 128, 128>}, {pipeline_mode = #tpu.pipeline_mode<synchronous>, transform_indices = @transform_2, window_bounds = array<i64: 128, 128>}, {pipeline_mode = #tpu.pipeline_mode<synchronous>, transform_indices = @transform_3, window_bounds = array<i64: 1, 128>}, {pipeline_mode = #tpu.pipeline_mode<synchronous>, transform_indices = @transform_4, window_bounds = array<i64: 128, 128>}, {pipeline_mode = #tpu.pipeline_mode<synchronous>, transform_indices = @transform_5, window_bounds = array<i64: 1, 128>}, {pipeline_mode = #tpu.pipeline_mode<synchronous>, transform_indices = @transform_6, window_bounds = array<i64: 8, 128>}]} {
    %c0 = arith.constant 0 : index
    %c0_0 = arith.constant 0 : index
    %c0_1 = arith.constant 0 : index
    %0 = vector.load %arg1[%c0, %c0_0, %c0_1] : memref<8x8x128xf32, #tpu.memory_space<vmem>>, vector<8x8x128xf32>
    %1 = vector.shape_cast %0 : vector<8x8x128xf32> to vector<64x128xf32>
    %c0_2 = arith.constant 0 : index
    %c0_3 = arith.constant 0 : index
    %2 = vector.load %arg2[%c0_2, %c0_3] : memref<128x128xf32, #tpu.memory_space<vmem>>, vector<128x128xf32>
    %cst = arith.constant dense<0.000000e+00> : vector<64x128xf32>
    %3 = tpu.matmul %1, %2, %cst {dimension_numbers = #tpu.dot_dimension_numbers<[1], [0], [0], [1], [0, 0, 1, 1], [], []>} : vector<64x128xf32>, vector<128x128xf32>, vector<64x128xf32> -> vector<64x128xf32>
    %c0_4 = arith.constant 0 : index
    %c0_5 = arith.constant 0 : index
    %4 = vector.load %arg4[%c0_4, %c0_5] : memref<1x128xf32, #tpu.memory_space<vmem>>, vector<1x128xf32>
    %5 = vector.shape_cast %4 : vector<1x128xf32> to vector<1x128xf32>
    %6 = vector.broadcast %5 : vector<1x128xf32> to vector<64x128xf32>
    %7 = arith.addf %3, %6 : vector<64x128xf32>
    %8 = vector.shape_cast %7 : vector<64x128xf32> to vector<8x8x128xf32>
    %c0_6 = arith.constant 0 : index
    %c0_7 = arith.constant 0 : index
    %c0_8 = arith.constant 0 : index
    %9 = vector.load %arg8[%c0_6, %c0_7, %c0_8] : memref<8x8x128xf32, #tpu.memory_space<vmem>>, vector<8x8x128xf32>
    tpu.vector_store %arg8[%c0_6, %c0_7, %c0_8], %8 {strides = array<i32>} : memref<8x8x128xf32, #tpu.memory_space<vmem>>, vector<8x8x128xf32>,
    %c0_9 = arith.constant 0 : index
    %c0_10 = arith.constant 0 : index
    %10 = vector.load %arg3[%c0_9, %c0_10] : memref<128x128xf32, #tpu.memory_space<vmem>>, vector<128x128xf32>
    %cst_11 = arith.constant 0.000000e+00 : f32
    %11 = vector.broadcast %cst_11 : f32 to vector<8x128xf32>
    %c0_i32 = arith.constant 0 : i32
    %12 = arith.index_cast %c0_i32 : i32 to index
    %c0_12 = arith.constant 0 : index
    %c0_13 = arith.constant 0 : index
    %13 = vector.load %arg8[%12, %c0_12, %c0_13] : memref<8x8x128xf32, #tpu.memory_space<vmem>>, vector<1x8x128xf32>
    %14 = vector.shape_cast %13 : vector<1x8x128xf32> to vector<8x128xf32>
    %cst_14 = arith.constant dense<0.000000e+00> : vector<8x128xf32>
    %15 = tpu.matmul %11, %10, %cst_14 {dimension_numbers = #tpu.dot_dimension_numbers<[1], [0], [0], [1], [0, 0, 1, 1], [], []>} : vector<8x128xf32>, vector<128x128xf32>, vector<8x128xf32> -> vector<8x128xf32>
    %16 = arith.addf %14, %15 : vector<8x128xf32>
    %17 = math.tanh %16 : vector<8x128xf32>
    %c1_i32 = arith.constant 1 : i32
    %18 = arith.index_cast %c1_i32 : i32 to index
    %c0_15 = arith.constant 0 : index
    %c0_16 = arith.constant 0 : index
    %19 = vector.load %arg8[%18, %c0_15, %c0_16] : memref<8x8x128xf32, #tpu.memory_space<vmem>>, vector<1x8x128xf32>
    %20 = vector.shape_cast %19 : vector<1x8x128xf32> to vector<8x128xf32>
    %cst_17 = arith.constant dense<0.000000e+00> : vector<8x128xf32>
    %21 = tpu.matmul %17, %10, %cst_17 {dimension_numbers = #tpu.dot_dimension_numbers<[1], [0], [0], [1], [0, 0, 1, 1], [], []>} : vector<8x128xf32>, vector<128x128xf32>, vector<8x128xf32> -> vector<8x128xf32>
    %22 = arith.addf %20, %21 : vector<8x128xf32>
    %23 = math.tanh %22 : vector<8x128xf32>
    %c2_i32 = arith.constant 2 : i32
    %24 = arith.index_cast %c2_i32 : i32 to index
    %c0_18 = arith.constant 0 : index
    %c0_19 = arith.constant 0 : index
    %25 = vector.load %arg8[%24, %c0_18, %c0_19] : memref<8x8x128xf32, #tpu.memory_space<vmem>>, vector<1x8x128xf32>
    %26 = vector.shape_cast %25 : vector<1x8x128xf32> to vector<8x128xf32>
    %cst_20 = arith.constant dense<0.000000e+00> : vector<8x128xf32>
    %27 = tpu.matmul %23, %10, %cst_20 {dimension_numbers = #tpu.dot_dimension_numbers<[1], [0], [0], [1], [0, 0, 1, 1], [], []>} : vector<8x128xf32>, vector<128x128xf32>, vector<8x128xf32> -> vector<8x128xf32>
    %28 = arith.addf %26, %27 : vector<8x128xf32>
    %29 = math.tanh %28 : vector<8x128xf32>
    %c3_i32 = arith.constant 3 : i32
    %30 = arith.index_cast %c3_i32 : i32 to index
    %c0_21 = arith.constant 0 : index
    %c0_22 = arith.constant 0 : index
    %31 = vector.load %arg8[%30, %c0_21, %c0_22] : memref<8x8x128xf32, #tpu.memory_space<vmem>>, vector<1x8x128xf32>
    %32 = vector.shape_cast %31 : vector<1x8x128xf32> to vector<8x128xf32>
    %cst_23 = arith.constant dense<0.000000e+00> : vector<8x128xf32>
    %33 = tpu.matmul %29, %10, %cst_23 {dimension_numbers = #tpu.dot_dimension_numbers<[1], [0], [0], [1], [0, 0, 1, 1], [], []>} : vector<8x128xf32>, vector<128x128xf32>, vector<8x128xf32> -> vector<8x128xf32>
    %34 = arith.addf %32, %33 : vector<8x128xf32>
    %35 = math.tanh %34 : vector<8x128xf32>
    %c4_i32 = arith.constant 4 : i32
    %36 = arith.index_cast %c4_i32 : i32 to index
    %c0_24 = arith.constant 0 : index
    %c0_25 = arith.constant 0 : index
    %37 = vector.load %arg8[%36, %c0_24, %c0_25] : memref<8x8x128xf32, #tpu.memory_space<vmem>>, vector<1x8x128xf32>
    %38 = vector.shape_cast %37 : vector<1x8x128xf32> to vector<8x128xf32>
    %cst_26 = arith.constant dense<0.000000e+00> : vector<8x128xf32>
    %39 = tpu.matmul %35, %10, %cst_26 {dimension_numbers = #tpu.dot_dimension_numbers<[1], [0], [0], [1], [0, 0, 1, 1], [], []>} : vector<8x128xf32>, vector<128x128xf32>, vector<8x128xf32> -> vector<8x128xf32>
    %40 = arith.addf %38, %39 : vector<8x128xf32>
    %41 = math.tanh %40 : vector<8x128xf32>
    %c5_i32 = arith.constant 5 : i32
    %42 = arith.index_cast %c5_i32 : i32 to index
    %c0_27 = arith.constant 0 : index
    %c0_28 = arith.constant 0 : index
    %43 = vector.load %arg8[%42, %c0_27, %c0_28] : memref<8x8x128xf32, #tpu.memory_space<vmem>>, vector<1x8x128xf32>
    %44 = vector.shape_cast %43 : vector<1x8x128xf32> to vector<8x128xf32>
    %cst_29 = arith.constant dense<0.000000e+00> : vector<8x128xf32>
    %45 = tpu.matmul %41, %10, %cst_29 {dimension_numbers = #tpu.dot_dimension_numbers<[1], [0], [0], [1], [0, 0, 1, 1], [], []>} : vector<8x128xf32>, vector<128x128xf32>, vector<8x128xf32> -> vector<8x128xf32>
    %46 = arith.addf %44, %45 : vector<8x128xf32>
    %47 = math.tanh %46 : vector<8x128xf32>
    %c6_i32 = arith.constant 6 : i32
    %48 = arith.index_cast %c6_i32 : i32 to index
    %c0_30 = arith.constant 0 : index
    %c0_31 = arith.constant 0 : index
    %49 = vector.load %arg8[%48, %c0_30, %c0_31] : memref<8x8x128xf32, #tpu.memory_space<vmem>>, vector<1x8x128xf32>
    %50 = vector.shape_cast %49 : vector<1x8x128xf32> to vector<8x128xf32>
    %cst_32 = arith.constant dense<0.000000e+00> : vector<8x128xf32>
    %51 = tpu.matmul %47, %10, %cst_32 {dimension_numbers = #tpu.dot_dimension_numbers<[1], [0], [0], [1], [0, 0, 1, 1], [], []>} : vector<8x128xf32>, vector<128x128xf32>, vector<8x128xf32> -> vector<8x128xf32>
    %52 = arith.addf %50, %51 : vector<8x128xf32>
    %53 = math.tanh %52 : vector<8x128xf32>
    %c7_i32 = arith.constant 7 : i32
    %54 = arith.index_cast %c7_i32 : i32 to index
    %c0_33 = arith.constant 0 : index
    %c0_34 = arith.constant 0 : index
    %55 = vector.load %arg8[%54, %c0_33, %c0_34] : memref<8x8x128xf32, #tpu.memory_space<vmem>>, vector<1x8x128xf32>
    %56 = vector.shape_cast %55 : vector<1x8x128xf32> to vector<8x128xf32>
    %cst_35 = arith.constant dense<0.000000e+00> : vector<8x128xf32>
    %57 = tpu.matmul %53, %10, %cst_35 {dimension_numbers = #tpu.dot_dimension_numbers<[1], [0], [0], [1], [0, 0, 1, 1], [], []>} : vector<8x128xf32>, vector<128x128xf32>, vector<8x128xf32> -> vector<8x128xf32>
    %58 = arith.addf %56, %57 : vector<8x128xf32>
    %59 = math.tanh %58 : vector<8x128xf32>
    %c8_i32 = arith.constant 8 : i32
    %c0_36 = arith.constant 0 : index
    %c0_37 = arith.constant 0 : index
    %60 = vector.load %arg5[%c0_36, %c0_37] : memref<128x128xf32, #tpu.memory_space<vmem>>, vector<128x128xf32>
    %cst_38 = arith.constant dense<0.000000e+00> : vector<8x128xf32>
    %61 = tpu.matmul %59, %60, %cst_38 {dimension_numbers = #tpu.dot_dimension_numbers<[1], [0], [0], [1], [0, 0, 1, 1], [], []>} : vector<8x128xf32>, vector<128x128xf32>, vector<8x128xf32> -> vector<8x128xf32>
    %c0_39 = arith.constant 0 : index
    %c0_40 = arith.constant 0 : index
    %62 = vector.load %arg6[%c0_39, %c0_40] : memref<1x128xf32, #tpu.memory_space<vmem>>, vector<1x128xf32>
    %63 = vector.shape_cast %62 : vector<1x128xf32> to vector<1x128xf32>
    %64 = vector.broadcast %63 : vector<1x128xf32> to vector<8x128xf32>
    %65 = arith.addf %61, %64 : vector<8x128xf32>
    %c0_41 = arith.constant 0 : index
    %c0_42 = arith.constant 0 : index
    %66 = vector.load %arg7[%c0_41, %c0_42] : memref<8x128xf32, #tpu.memory_space<vmem>>, vector<8x128xf32>
    tpu.vector_store %arg7[%c0_41, %c0_42], %65 {strides = array<i32>} : memref<8x128xf32, #tpu.memory_space<vmem>>, vector<8x128xf32>,
    return
  }
  func.func @transform_0(%arg0: i32) -> (i32, i32, i32) {
    %c0_i32 = arith.constant 0 : i32
    %c0_i32_0 = arith.constant 0 : i32
    %c0_i32_1 = arith.constant 0 : i32
    %c0_i32_2 = arith.constant 0 : i32
    return %c0_i32, %c0_i32_0, %c0_i32_1 : i32, i32, i32
  }
  func.func @transform_1(%arg0: i32) -> (i32, i32) {
    %c0_i32 = arith.constant 0 : i32
    %c0_i32_0 = arith.constant 0 : i32
    %c0_i32_1 = arith.constant 0 : i32
    return %c0_i32, %c0_i32_0 : i32, i32
  }
  func.func @transform_2(%arg0: i32) -> (i32, i32) {
    %c0_i32 = arith.constant 0 : i32
    %c0_i32_0 = arith.constant 0 : i32
    %c0_i32_1 = arith.constant 0 : i32
    return %c0_i32, %c0_i32_0 : i32, i32
  }
  func.func @transform_3(%arg0: i32) -> (i32, i32) {
    %c0_i32 = arith.constant 0 : i32
    %c0_i32_0 = arith.constant 0 : i32
    %c0_i32_1 = arith.constant 0 : i32
    return %c0_i32, %c0_i32_0 : i32, i32
  }
  func.func @transform_4(%arg0: i32) -> (i32, i32) {
    %c0_i32 = arith.constant 0 : i32
    %c0_i32_0 = arith.constant 0 : i32
    %c0_i32_1 = arith.constant 0 : i32
    return %c0_i32, %c0_i32_0 : i32, i32
  }
  func.func @transform_5(%arg0: i32) -> (i32, i32) {
    %c0_i32 = arith.constant 0 : i32
    %c0_i32_0 = arith.constant 0 : i32
    %c0_i32_1 = arith.constant 0 : i32
    return %c0_i32, %c0_i32_0 : i32, i32
  }
  func.func @transform_6(%arg0: i32) -> (i32, i32) {
    %c0_i32 = arith.constant 0 : i32
    %c0_i32_0 = arith.constant 0 : i32
    %c0_i32_1 = arith.constant 0 : i32
    return %c0_i32, %c0_i32_0 : i32, i32
  }
}

</mosaic_0001>

<llo_original>
// kernel: simple_rnn_forward.1
$region0: #{simple_rnn_forward.1}
  #allocation0 [shape = 'u32[]', space=smem, size = 0x4, offset = 0x4, fixed_abs, tag = 'smem constant byte address 0x4 - core index']
  #allocation1 [shape = 'u32[144,128]{1,0:T(1,128)}', space=vmem, size = 0x12000, scoped, tag = 'internal scratch']
  #allocation2 [shape = 'f32[8,8,128]{2,1,0:T(8,128)}', space=vmem, size = 0x8000, scoped, tag = 'scratch operand']
  %s0 = inlined_call_operand.vmem [shape: f32[8,8,128], index: 0, kind: input, shape index: {}]
  %s1 = inlined_call_operand.vmem [shape: f32[128,128], index: 1, kind: input, shape index: {}]
  %s2 = inlined_call_operand.vmem [shape: f32[128,128], index: 2, kind: input, shape index: {}]
  %s3 = inlined_call_operand.vmem [shape: f32[1,128], index: 3, kind: input, shape index: {}]
  %s4 = inlined_call_operand.vmem [shape: f32[128,128], index: 4, kind: input, shape index: {}]
  %s5 = inlined_call_operand.vmem [shape: f32[1,128], index: 5, kind: input, shape index: {}]
  %s6 = inlined_call_operand.vmem [shape: f32[8,128], index: 6, kind: output, shape index: {}]
  %s7 = sld [smem:[#allocation0]]
  $region34: #{simple_rnn_forward.1} parent=0
    _
  %s9 = ssub.s32 1, %s7
  %s10 = scalar_select 0, %s9, %s7
  // Predicated region
  $region2: #{simple_rnn_forward.1} parent=0 // pred_check
    _
  $region3: #{simple_rnn_forward.1} parent=0 // pred_check_branch
    %12 = sbr.rel (0) target = $region5
  $region4: #{simple_rnn_forward.1} parent=0 // pred_region
    _
  $region5: #{simple_rnn_forward.1} parent=0 // pred_fallthru
    _
  // Predicated region
  $region6: #{simple_rnn_forward.1} parent=0 // pred_check
    _
  $region7: #{simple_rnn_forward.1} parent=0 // pred_check_branch
    %14 = sbr.rel (0) target = $region9
  $region8: #{simple_rnn_forward.1} parent=0 // pred_region
    _
  $region9: #{simple_rnn_forward.1} parent=0 // pred_fallthru
    _
  // Predicated region
  $region10: #{simple_rnn_forward.1} parent=0 // pred_check
    _
  $region11: #{simple_rnn_forward.1} parent=0 // pred_check_branch
    %16 = sbr.rel (0) target = $region13
  $region12: #{simple_rnn_forward.1} parent=0 // pred_region
    _
  $region13: #{simple_rnn_forward.1} parent=0 // pred_fallthru
    _
  // Predicated region
  $region14: #{simple_rnn_forward.1} parent=0 // pred_check
    _
  $region15: #{simple_rnn_forward.1} parent=0 // pred_check_branch
    %18 = sbr.rel (0) target = $region17
  $region16: #{simple_rnn_forward.1} parent=0 // pred_region
    _
  $region17: #{simple_rnn_forward.1} parent=0 // pred_fallthru
    _
  // Predicated region
  $region18: #{simple_rnn_forward.1} parent=0 // pred_check
    _
  $region19: #{simple_rnn_forward.1} parent=0 // pred_check_branch
    %20 = sbr.rel (0) target = $region21
  $region20: #{simple_rnn_forward.1} parent=0 // pred_region
    _
  $region21: #{simple_rnn_forward.1} parent=0 // pred_fallthru
    _
  // Predicated region
  $region22: #{simple_rnn_forward.1} parent=0 // pred_check
    _
  $region23: #{simple_rnn_forward.1} parent=0 // pred_check_branch
    %22 = sbr.rel (0) target = $region25
  $region24: #{simple_rnn_forward.1} parent=0 // pred_region
    _
  $region25: #{simple_rnn_forward.1} parent=0 // pred_fallthru
    _
  %v23 = vld [vmem:[%s0] sm:$0xff]
  %v24 = vld [vmem:[%s0 + $0x8] sm:$0xff]
  %v25 = vld [vmem:[%s0 + $0x10] sm:$0xff]
  %v26 = vld [vmem:[%s0 + $0x18] sm:$0xff]
  %v27 = vld [vmem:[%s0 + $0x20] sm:$0xff]
  %v28 = vld [vmem:[%s0 + $0x28] sm:$0xff]
  %v29 = vld [vmem:[%s0 + $0x30] sm:$0xff]
  %v30 = vld [vmem:[%s0 + $0x38] sm:$0xff]
  %v31 = vld [vmem:[%s1] sm:$0xff]
  %v32 = vld [vmem:[%s1 + $0x8] sm:$0xff]
  %v33 = vld [vmem:[%s1 + $0x10] sm:$0xff]
  %v34 = vld [vmem:[%s1 + $0x18] sm:$0xff]
  %v35 = vld [vmem:[%s1 + $0x20] sm:$0xff]
  %v36 = vld [vmem:[%s1 + $0x28] sm:$0xff]
  %v37 = vld [vmem:[%s1 + $0x30] sm:$0xff]
  %v38 = vld [vmem:[%s1 + $0x38] sm:$0xff]
  %v39 = vld [vmem:[%s1 + $0x40] sm:$0xff]
  %v40 = vld [vmem:[%s1 + $0x48] sm:$0xff]
  %v41 = vld [vmem:[%s1 + $0x50] sm:$0xff]
  %v42 = vld [vmem:[%s1 + $0x58] sm:$0xff]
  %v43 = vld [vmem:[%s1 + $0x60] sm:$0xff]
  %v44 = vld [vmem:[%s1 + $0x68] sm:$0xff]
  %v45 = vld [vmem:[%s1 + $0x70] sm:$0xff]
  %v46 = vld [vmem:[%s1 + $0x78] sm:$0xff]
  %v47 = vld [vmem:[%s3] sm:$0x1]
  %v49 = vlaneseq
  %v50 = vshrl.u32 %v49, 7
  %v51 = vsub.s32 0, %v50
  %v52 = vrot.slane %v47, %v51
  %54 = vmatprep.subr.mxu0 0.0
  %55 = vmatpush1.msra.mxu0 %v31
  %56 = vmatprep.subr.mxu0 0.0
  %57 = vmatpush1.msra.mxu0 %v32
  %58 = vmatprep.subr.mxu0 0.0
  %59 = vmatpush1.msra.mxu0 %v33
  %60 = vmatprep.subr.mxu0 0.0
  %61 = vmatpush1.msra.mxu0 %v34
  %62 = vmatprep.subr.mxu0 0.0
  %63 = vmatpush1.msra.mxu0 %v35
  %64 = vmatprep.subr.mxu0 0.0
  %65 = vmatpush1.msra.mxu0 %v36
  %66 = vmatprep.subr.mxu0 0.0
  %67 = vmatpush1.msra.mxu0 %v37
  %68 = vmatprep.subr.mxu0 0.0
  %69 = vmatpush1.msra.mxu0 %v38
  %70 = vmatprep.subr.mxu0 0.0
  %71 = vmatpush1.msra.mxu0 %v39
  %72 = vmatprep.subr.mxu0 0.0
  %73 = vmatpush1.msra.mxu0 %v40
  %74 = vmatprep.subr.mxu0 0.0
  %75 = vmatpush1.msra.mxu0 %v41
  %76 = vmatprep.subr.mxu0 0.0
  %77 = vmatpush1.msra.mxu0 %v42
  %78 = vmatprep.subr.mxu0 0.0
  %79 = vmatpush1.msra.mxu0 %v43
  %80 = vmatprep.subr.mxu0 0.0
  %81 = vmatpush1.msra.mxu0 %v44
  %82 = vmatprep.subr.mxu0 0.0
  %83 = vmatpush1.msra.mxu0 %v45
  %84 = vmatprep.subr.mxu0 0.0
  %85 = vmatpush1.msra.mxu0 %v46
  %86 = vmatprep.subr.mxu0 0.0
  %87 = vmatpush1.msra.mxu0 0.0
  %88 = vmatprep.subr.mxu0 0.0
  %89 = vmatpush1.msra.mxu0 0.0
  %90 = vmatprep.subr.mxu0 0.0
  %91 = vmatpush1.msra.mxu0 0.0
  %92 = vmatprep.subr.mxu0 0.0
  %93 = vmatpush1.msra.mxu0 0.0
  %94 = vmatprep.subr.mxu0 0.0
  %95 = vmatpush1.msra.mxu0 0.0
  %96 = vmatprep.subr.mxu0 0.0
  %97 = vmatpush1.msra.mxu0 0.0
  %98 = vmatprep.subr.mxu0 0.0
  %99 = vmatpush1.msra.mxu0 0.0
  %100 = vmatprep.subr.mxu0 0.0
  %101 = vmatpush1.msra.mxu0 0.0
  %102 = vmatprep.subr.mxu0 0.0
  %103 = vmatpush1.msra.mxu0 0.0
  %104 = vmatprep.subr.mxu0 0.0
  %105 = vmatpush1.msra.mxu0 0.0
  %106 = vmatprep.subr.mxu0 0.0
  %107 = vmatpush1.msra.mxu0 0.0
  %108 = vmatprep.subr.mxu0 0.0
  %109 = vmatpush1.msra.mxu0 0.0
  %110 = vmatprep.subr.mxu0 0.0
  %111 = vmatpush1.msra.mxu0 0.0
  %112 = vmatprep.subr.mxu0 0.0
  %113 = vmatpush1.msra.mxu0 0.0
  %114 = vmatprep.subr.mxu0 0.0
  %115 = vmatpush1.msra.mxu0 0.0
  %116 = vmatprep.subr.mxu0 0.0
  %117 = vmatpush1.msra.mxu0 0.0
  %118 = vmatprep.mubr.f32.mxu0 0.0
  %119 = vmatmul.mubr.f32.gmra.mrb[0].mxu0 %v23
  %v120 = vpop.f32.mrb[0].mxu0
  %v121 = vadd.f32 %v52, %v120
  %v122 = vpop.f32.mrb[0].mxu0
  %123 = vmatprep.mubr.f32.mxu0 0.0
  %124 = vmatmul.mubr.f32.gmra.mrb[0].mxu0 %v24
  %v125 = vpop.f32.mrb[0].mxu0
  %v126 = vadd.f32 %v52, %v125
  %v127 = vpop.f32.mrb[0].mxu0
  %128 = vmatprep.mubr.f32.mxu0 0.0
  %129 = vmatmul.mubr.f32.gmra.mrb[0].mxu0 %v25
  %v130 = vpop.f32.mrb[0].mxu0
  %v131 = vadd.f32 %v52, %v130
  %v132 = vpop.f32.mrb[0].mxu0
  %133 = vmatprep.mubr.f32.mxu0 0.0
  %134 = vmatmul.mubr.f32.gmra.mrb[0].mxu0 %v26
  %v135 = vpop.f32.mrb[0].mxu0
  %v136 = vadd.f32 %v52, %v135
  %v137 = vpop.f32.mrb[0].mxu0
  %138 = vmatprep.mubr.f32.mxu0 0.0
  %139 = vmatmul.mubr.f32.gmra.mrb[0].mxu0 %v27
  %v140 = vpop.f32.mrb[0].mxu0
  %v141 = vadd.f32 %v52, %v140
  %v142 = vpop.f32.mrb[0].mxu0
  %143 = vmatprep.mubr.f32.mxu0 0.0
  %144 = vmatmul.mubr.f32.gmra.mrb[0].mxu0 %v28
  %v145 = vpop.f32.mrb[0].mxu0
  %v146 = vadd.f32 %v52, %v145
  %v147 = vpop.f32.mrb[0].mxu0
  %148 = vmatprep.mubr.f32.mxu0 0.0
  %149 = vmatmul.mubr.f32.gmra.mrb[0].mxu0 %v29
  %v150 = vpop.f32.mrb[0].mxu0
  %v151 = vadd.f32 %v52, %v150
  %v152 = vpop.f32.mrb[0].mxu0
  %153 = vmatprep.mubr.f32.mxu0 0.0
  %154 = vmatmul.mubr.f32.gmra.mrb[0].mxu0 %v30
  %v155 = vpop.f32.mrb[0].mxu0
  %v156 = vadd.f32 %v52, %v155
  %v157 = vpop.f32.mrb[0].mxu0
  %158 = vdwg.mxu0
  %159 = vst [vmem:[#allocation2] sm:$0xff] %v121
  %160 = vst [vmem:[#allocation2 + $0x8] sm:$0xff] %v126
  %161 = vst [vmem:[#allocation2 + $0x10] sm:$0xff] %v131
  %162 = vst [vmem:[#allocation2 + $0x18] sm:$0xff] %v136
  %163 = vst [vmem:[#allocation2 + $0x20] sm:$0xff] %v141
  %164 = vst [vmem:[#allocation2 + $0x28] sm:$0xff] %v146
  %165 = vst [vmem:[#allocation2 + $0x30] sm:$0xff] %v151
  %166 = vst [vmem:[#allocation2 + $0x38] sm:$0xff] %v156
  %v167 = vld [vmem:[%s2] sm:$0xff]
  %v168 = vld [vmem:[%s2 + $0x8] sm:$0xff]
  %v169 = vld [vmem:[%s2 + $0x10] sm:$0xff]
  %v170 = vld [vmem:[%s2 + $0x18] sm:$0xff]
  %v171 = vld [vmem:[%s2 + $0x20] sm:$0xff]
  %v172 = vld [vmem:[%s2 + $0x28] sm:$0xff]
  %v173 = vld [vmem:[%s2 + $0x30] sm:$0xff]
  %v174 = vld [vmem:[%s2 + $0x38] sm:$0xff]
  %v175 = vld [vmem:[%s2 + $0x40] sm:$0xff]
  %v176 = vld [vmem:[%s2 + $0x48] sm:$0xff]
  %v177 = vld [vmem:[%s2 + $0x50] sm:$0xff]
  %v178 = vld [vmem:[%s2 + $0x58] sm:$0xff]
  %v179 = vld [vmem:[%s2 + $0x60] sm:$0xff]
  %v180 = vld [vmem:[%s2 + $0x68] sm:$0xff]
  %v181 = vld [vmem:[%s2 + $0x70] sm:$0xff]
  %v182 = vld [vmem:[%s2 + $0x78] sm:$0xff]
  %v183 = vld [vmem:[#allocation2] sm:$0xff]
  %184 = vmatprep.subr.mxu0 0.0
  %185 = vmatpush1.msra.mxu0 %v167
  %186 = vmatprep.subr.mxu0 0.0
  %187 = vmatpush1.msra.mxu0 %v168
  %188 = vmatprep.subr.mxu0 0.0
  %189 = vmatpush1.msra.mxu0 %v169
  %190 = vmatprep.subr.mxu0 0.0
  %191 = vmatpush1.msra.mxu0 %v170
  %192 = vmatprep.subr.mxu0 0.0
  %193 = vmatpush1.msra.mxu0 %v171
  %194 = vmatprep.subr.mxu0 0.0
  %195 = vmatpush1.msra.mxu0 %v172
  %196 = vmatprep.subr.mxu0 0.0
  %197 = vmatpush1.msra.mxu0 %v173
  %198 = vmatprep.subr.mxu0 0.0
  %199 = vmatpush1.msra.mxu0 %v174
  %200 = vmatprep.subr.mxu0 0.0
  %201 = vmatpush1.msra.mxu0 %v175
  %202 = vmatprep.subr.mxu0 0.0
  %203 = vmatpush1.msra.mxu0 %v176
  %204 = vmatprep.subr.mxu0 0.0
  %205 = vmatpush1.msra.mxu0 %v177
  %206 = vmatprep.subr.mxu0 0.0
  %207 = vmatpush1.msra.mxu0 %v178
  %208 = vmatprep.subr.mxu0 0.0
  %209 = vmatpush1.msra.mxu0 %v179
  %210 = vmatprep.subr.mxu0 0.0
  %211 = vmatpush1.msra.mxu0 %v180
  %212 = vmatprep.subr.mxu0 0.0
  %213 = vmatpush1.msra.mxu0 %v181
  %214 = vmatprep.subr.mxu0 0.0
  %215 = vmatpush1.msra.mxu0 %v182
  %216 = vmatprep.subr.mxu0 0.0
  %217 = vmatpush1.msra.mxu0 0.0
  %218 = vmatprep.subr.mxu0 0.0
  %219 = vmatpush1.msra.mxu0 0.0
  %220 = vmatprep.subr.mxu0 0.0
  %221 = vmatpush1.msra.mxu0 0.0
  %222 = vmatprep.subr.mxu0 0.0
  %223 = vmatpush1.msra.mxu0 0.0
  %224 = vmatprep.subr.mxu0 0.0
  %225 = vmatpush1.msra.mxu0 0.0
  %226 = vmatprep.subr.mxu0 0.0
  %227 = vmatpush1.msra.mxu0 0.0
  %228 = vmatprep.subr.mxu0 0.0
  %229 = vmatpush1.msra.mxu0 0.0
  %230 = vmatprep.subr.mxu0 0.0
  %231 = vmatpush1.msra.mxu0 0.0
  %232 = vmatprep.subr.mxu0 0.0
  %233 = vmatpush1.msra.mxu0 0.0
  %234 = vmatprep.subr.mxu0 0.0
  %235 = vmatpush1.msra.mxu0 0.0
  %236 = vmatprep.subr.mxu0 0.0
  %237 = vmatpush1.msra.mxu0 0.0
  %238 = vmatprep.subr.mxu0 0.0
  %239 = vmatpush1.msra.mxu0 0.0
  %240 = vmatprep.subr.mxu0 0.0
  %241 = vmatpush1.msra.mxu0 0.0
  %242 = vmatprep.subr.mxu0 0.0
  %243 = vmatpush1.msra.mxu0 0.0
  %244 = vmatprep.subr.mxu0 0.0
  %245 = vmatpush1.msra.mxu0 0.0
  %246 = vmatprep.subr.mxu0 0.0
  %247 = vmatpush1.msra.mxu0 0.0
  %248 = vmatprep.mubr.f32.mxu0 0.0
  %249 = vmatmul.mubr.f32.gmra.mrb[0].mxu0 0.0
  %v250 = vpop.f32.mrb[0].mxu0
  %v251 = vadd.f32 0.0, %v250
  %v252 = vpop.f32.mrb[0].mxu0
  %253 = vdwg.mxu0
  %v254 = vadd.f32 %v183, %v251
  %v255 = vtanh.pop %v254
  %s256 = scalar_lea.vmem [#allocation2], 8
  %v257 = vld [vmem:[%s256] sm:$0xff]
  %258 = vmatprep.subr.mxu0 0.0
  %259 = vmatpush1.msra.mxu0 %v167
  %260 = vmatprep.subr.mxu0 0.0
  %261 = vmatpush1.msra.mxu0 %v168
  %262 = vmatprep.subr.mxu0 0.0
  %263 = vmatpush1.msra.mxu0 %v169
  %264 = vmatprep.subr.mxu0 0.0
  %265 = vmatpush1.msra.mxu0 %v170
  %266 = vmatprep.subr.mxu0 0.0
  %267 = vmatpush1.msra.mxu0 %v171
  %268 = vmatprep.subr.mxu0 0.0
  %269 = vmatpush1.msra.mxu0 %v172
  %270 = vmatprep.subr.mxu0 0.0
  %271 = vmatpush1.msra.mxu0 %v173
  %272 = vmatprep.subr.mxu0 0.0
  %273 = vmatpush1.msra.mxu0 %v174
  %274 = vmatprep.subr.mxu0 0.0
  %275 = vmatpush1.msra.mxu0 %v175
  %276 = vmatprep.subr.mxu0 0.0
  %277 = vmatpush1.msra.mxu0 %v176
  %278 = vmatprep.subr.mxu0 0.0
  %279 = vmatpush1.msra.mxu0 %v177
  %280 = vmatprep.subr.mxu0 0.0
  %281 = vmatpush1.msra.mxu0 %v178
  %282 = vmatprep.subr.mxu0 0.0
  %283 = vmatpush1.msra.mxu0 %v179
  %284 = vmatprep.subr.mxu0 0.0
  %285 = vmatpush1.msra.mxu0 %v180
  %286 = vmatprep.subr.mxu0 0.0
  %287 = vmatpush1.msra.mxu0 %v181
  %288 = vmatprep.subr.mxu0 0.0
  %289 = vmatpush1.msra.mxu0 %v182
  %290 = vmatprep.subr.mxu0 0.0
  %291 = vmatpush1.msra.mxu0 0.0
  %292 = vmatprep.subr.mxu0 0.0
  %293 = vmatpush1.msra.mxu0 0.0
  %294 = vmatprep.subr.mxu0 0.0
  %295 = vmatpush1.msra.mxu0 0.0
  %296 = vmatprep.subr.mxu0 0.0
  %297 = vmatpush1.msra.mxu0 0.0
  %298 = vmatprep.subr.mxu0 0.0
  %299 = vmatpush1.msra.mxu0 0.0
  %300 = vmatprep.subr.mxu0 0.0
  %301 = vmatpush1.msra.mxu0 0.0
  %302 = vmatprep.subr.mxu0 0.0
  %303 = vmatpush1.msra.mxu0 0.0
  %304 = vmatprep.subr.mxu0 0.0
  %305 = vmatpush1.msra.mxu0 0.0
  %306 = vmatprep.subr.mxu0 0.0
  %307 = vmatpush1.msra.mxu0 0.0
  %308 = vmatprep.subr.mxu0 0.0
  %309 = vmatpush1.msra.mxu0 0.0
  %310 = vmatprep.subr.mxu0 0.0
  %311 = vmatpush1.msra.mxu0 0.0
  %312 = vmatprep.subr.mxu0 0.0
  %313 = vmatpush1.msra.mxu0 0.0
  %314 = vmatprep.subr.mxu0 0.0
  %315 = vmatpush1.msra.mxu0 0.0
  %316 = vmatprep.subr.mxu0 0.0
  %317 = vmatpush1.msra.mxu0 0.0
  %318 = vmatprep.subr.mxu0 0.0
  %319 = vmatpush1.msra.mxu0 0.0
  %320 = vmatprep.subr.mxu0 0.0
  %321 = vmatpush1.msra.mxu0 0.0
  %322 = vmatprep.mubr.f32.mxu0 0.0
  %323 = vmatmul.mubr.f32.gmra.mrb[0].mxu0 %v255
  %v324 = vpop.f32.mrb[0].mxu0
  %v325 = vadd.f32 0.0, %v324
  %v326 = vpop.f32.mrb[0].mxu0
  %327 = vdwg.mxu0
  %v328 = vadd.f32 %v257, %v325
  %v329 = vtanh.pop %v328
  %s330 = scalar_lea.vmem [#allocation2], 16
  %v331 = vld [vmem:[%s330] sm:$0xff]
  %332 = vmatprep.subr.mxu0 0.0
  %333 = vmatpush1.msra.mxu0 %v167
  %334 = vmatprep.subr.mxu0 0.0
  %335 = vmatpush1.msra.mxu0 %v168
  %336 = vmatprep.subr.mxu0 0.0
  %337 = vmatpush1.msra.mxu0 %v169
  %338 = vmatprep.subr.mxu0 0.0
  %339 = vmatpush1.msra.mxu0 %v170
  %340 = vmatprep.subr.mxu0 0.0
  %341 = vmatpush1.msra.mxu0 %v171
  %342 = vmatprep.subr.mxu0 0.0
  %343 = vmatpush1.msra.mxu0 %v172
  %344 = vmatprep.subr.mxu0 0.0
  %345 = vmatpush1.msra.mxu0 %v173
  %346 = vmatprep.subr.mxu0 0.0
  %347 = vmatpush1.msra.mxu0 %v174
  %348 = vmatprep.subr.mxu0 0.0
  %349 = vmatpush1.msra.mxu0 %v175
  %350 = vmatprep.subr.mxu0 0.0
  %351 = vmatpush1.msra.mxu0 %v176
  %352 = vmatprep.subr.mxu0 0.0
  %353 = vmatpush1.msra.mxu0 %v177
  %354 = vmatprep.subr.mxu0 0.0
  %355 = vmatpush1.msra.mxu0 %v178
  %356 = vmatprep.subr.mxu0 0.0
  %357 = vmatpush1.msra.mxu0 %v179
  %358 = vmatprep.subr.mxu0 0.0
  %359 = vmatpush1.msra.mxu0 %v180
  %360 = vmatprep.subr.mxu0 0.0
  %361 = vmatpush1.msra.mxu0 %v181
  %362 = vmatprep.subr.mxu0 0.0
  %363 = vmatpush1.msra.mxu0 %v182
  %364 = vmatprep.subr.mxu0 0.0
  %365 = vmatpush1.msra.mxu0 0.0
  %366 = vmatprep.subr.mxu0 0.0
  %367 = vmatpush1.msra.mxu0 0.0
  %368 = vmatprep.subr.mxu0 0.0
  %369 = vmatpush1.msra.mxu0 0.0
  %370 = vmatprep.subr.mxu0 0.0
  %371 = vmatpush1.msra.mxu0 0.0
  %372 = vmatprep.subr.mxu0 0.0
  %373 = vmatpush1.msra.mxu0 0.0
  %374 = vmatprep.subr.mxu0 0.0
  %375 = vmatpush1.msra.mxu0 0.0
  %376 = vmatprep.subr.mxu0 0.0
  %377 = vmatpush1.msra.mxu0 0.0
  %378 = vmatprep.subr.mxu0 0.0
  %379 = vmatpush1.msra.mxu0 0.0
  %380 = vmatprep.subr.mxu0 0.0
  %381 = vmatpush1.msra.mxu0 0.0
  %382 = vmatprep.subr.mxu0 0.0
  %383 = vmatpush1.msra.mxu0 0.0
  %384 = vmatprep.subr.mxu0 0.0
  %385 = vmatpush1.msra.mxu0 0.0
  %386 = vmatprep.subr.mxu0 0.0
  %387 = vmatpush1.msra.mxu0 0.0
  %388 = vmatprep.subr.mxu0 0.0
  %389 = vmatpush1.msra.mxu0 0.0
  %390 = vmatprep.subr.mxu0 0.0
  %391 = vmatpush1.msra.mxu0 0.0
  %392 = vmatprep.subr.mxu0 0.0
  %393 = vmatpush1.msra.mxu0 0.0
  %394 = vmatprep.subr.mxu0 0.0
  %395 = vmatpush1.msra.mxu0 0.0
  %396 = vmatprep.mubr.f32.mxu0 0.0
  %397 = vmatmul.mubr.f32.gmra.mrb[0].mxu0 %v329
  %v398 = vpop.f32.mrb[0].mxu0
  %v399 = vadd.f32 0.0, %v398
  %v400 = vpop.f32.mrb[0].mxu0
  %401 = vdwg.mxu0
  %v402 = vadd.f32 %v331, %v399
  %v403 = vtanh.pop %v402
  %s404 = scalar_lea.vmem [#allocation2], 24
  %v405 = vld [vmem:[%s404] sm:$0xff]
  %406 = vmatprep.subr.mxu0 0.0
  %407 = vmatpush1.msra.mxu0 %v167
  %408 = vmatprep.subr.mxu0 0.0
  %409 = vmatpush1.msra.mxu0 %v168
  %410 = vmatprep.subr.mxu0 0.0
  %411 = vmatpush1.msra.mxu0 %v169
  %412 = vmatprep.subr.mxu0 0.0
  %413 = vmatpush1.msra.mxu0 %v170
  %414 = vmatprep.subr.mxu0 0.0
  %415 = vmatpush1.msra.mxu0 %v171
  %416 = vmatprep.subr.mxu0 0.0
  %417 = vmatpush1.msra.mxu0 %v172
  %418 = vmatprep.subr.mxu0 0.0
  %419 = vmatpush1.msra.mxu0 %v173
  %420 = vmatprep.subr.mxu0 0.0
  %421 = vmatpush1.msra.mxu0 %v174
  %422 = vmatprep.subr.mxu0 0.0
  %423 = vmatpush1.msra.mxu0 %v175
  %424 = vmatprep.subr.mxu0 0.0
  %425 = vmatpush1.msra.mxu0 %v176
  %426 = vmatprep.subr.mxu0 0.0
  %427 = vmatpush1.msra.mxu0 %v177
  %428 = vmatprep.subr.mxu0 0.0
  %429 = vmatpush1.msra.mxu0 %v178
  %430 = vmatprep.subr.mxu0 0.0
  %431 = vmatpush1.msra.mxu0 %v179
  %432 = vmatprep.subr.mxu0 0.0
  %433 = vmatpush1.msra.mxu0 %v180
  %434 = vmatprep.subr.mxu0 0.0
  %435 = vmatpush1.msra.mxu0 %v181
  %436 = vmatprep.subr.mxu0 0.0
  %437 = vmatpush1.msra.mxu0 %v182
  %438 = vmatprep.subr.mxu0 0.0
  %439 = vmatpush1.msra.mxu0 0.0
  %440 = vmatprep.subr.mxu0 0.0
  %441 = vmatpush1.msra.mxu0 0.0
  %442 = vmatprep.subr.mxu0 0.0
  %443 = vmatpush1.msra.mxu0 0.0
  %444 = vmatprep.subr.mxu0 0.0
  %445 = vmatpush1.msra.mxu0 0.0
  %446 = vmatprep.subr.mxu0 0.0
  %447 = vmatpush1.msra.mxu0 0.0
  %448 = vmatprep.subr.mxu0 0.0
  %449 = vmatpush1.msra.mxu0 0.0
  %450 = vmatprep.subr.mxu0 0.0
  %451 = vmatpush1.msra.mxu0 0.0
  %452 = vmatprep.subr.mxu0 0.0
  %453 = vmatpush1.msra.mxu0 0.0
  %454 = vmatprep.subr.mxu0 0.0
  %455 = vmatpush1.msra.mxu0 0.0
  %456 = vmatprep.subr.mxu0 0.0
  %457 = vmatpush1.msra.mxu0 0.0
  %458 = vmatprep.subr.mxu0 0.0
  %459 = vmatpush1.msra.mxu0 0.0
  %460 = vmatprep.subr.mxu0 0.0
  %461 = vmatpush1.msra.mxu0 0.0
  %462 = vmatprep.subr.mxu0 0.0
  %463 = vmatpush1.msra.mxu0 0.0
  %464 = vmatprep.subr.mxu0 0.0
  %465 = vmatpush1.msra.mxu0 0.0
  %466 = vmatprep.subr.mxu0 0.0
  %467 = vmatpush1.msra.mxu0 0.0
  %468 = vmatprep.subr.mxu0 0.0
  %469 = vmatpush1.msra.mxu0 0.0
  %470 = vmatprep.mubr.f32.mxu0 0.0
  %471 = vmatmul.mubr.f32.gmra.mrb[0].mxu0 %v403
  %v472 = vpop.f32.mrb[0].mxu0
  %v473 = vadd.f32 0.0, %v472
  %v474 = vpop.f32.mrb[0].mxu0
  %475 = vdwg.mxu0
  %v476 = vadd.f32 %v405, %v473
  %v477 = vtanh.pop %v476
  %s478 = scalar_lea.vmem [#allocation2], 32
  %v479 = vld [vmem:[%s478] sm:$0xff]
  %480 = vmatprep.subr.mxu0 0.0
  %481 = vmatpush1.msra.mxu0 %v167
  %482 = vmatprep.subr.mxu0 0.0
  %483 = vmatpush1.msra.mxu0 %v168
  %484 = vmatprep.subr.mxu0 0.0
  %485 = vmatpush1.msra.mxu0 %v169
  %486 = vmatprep.subr.mxu0 0.0
  %487 = vmatpush1.msra.mxu0 %v170
  %488 = vmatprep.subr.mxu0 0.0
  %489 = vmatpush1.msra.mxu0 %v171
  %490 = vmatprep.subr.mxu0 0.0
  %491 = vmatpush1.msra.mxu0 %v172
  %492 = vmatprep.subr.mxu0 0.0
  %493 = vmatpush1.msra.mxu0 %v173
  %494 = vmatprep.subr.mxu0 0.0
  %495 = vmatpush1.msra.mxu0 %v174
  %496 = vmatprep.subr.mxu0 0.0
  %497 = vmatpush1.msra.mxu0 %v175
  %498 = vmatprep.subr.mxu0 0.0
  %499 = vmatpush1.msra.mxu0 %v176
  %500 = vmatprep.subr.mxu0 0.0
  %501 = vmatpush1.msra.mxu0 %v177
  %502 = vmatprep.subr.mxu0 0.0
  %503 = vmatpush1.msra.mxu0 %v178
  %504 = vmatprep.subr.mxu0 0.0
  %505 = vmatpush1.msra.mxu0 %v179
  %506 = vmatprep.subr.mxu0 0.0
  %507 = vmatpush1.msra.mxu0 %v180
  %508 = vmatprep.subr.mxu0 0.0
  %509 = vmatpush1.msra.mxu0 %v181
  %510 = vmatprep.subr.mxu0 0.0
  %511 = vmatpush1.msra.mxu0 %v182
  %512 = vmatprep.subr.mxu0 0.0
  %513 = vmatpush1.msra.mxu0 0.0
  %514 = vmatprep.subr.mxu0 0.0
  %515 = vmatpush1.msra.mxu0 0.0
  %516 = vmatprep.subr.mxu0 0.0
  %517 = vmatpush1.msra.mxu0 0.0
  %518 = vmatprep.subr.mxu0 0.0
  %519 = vmatpush1.msra.mxu0 0.0
  %520 = vmatprep.subr.mxu0 0.0
  %521 = vmatpush1.msra.mxu0 0.0
  %522 = vmatprep.subr.mxu0 0.0
  %523 = vmatpush1.msra.mxu0 0.0
  %524 = vmatprep.subr.mxu0 0.0
  %525 = vmatpush1.msra.mxu0 0.0
  %526 = vmatprep.subr.mxu0 0.0
  %527 = vmatpush1.msra.mxu0 0.0
  %528 = vmatprep.subr.mxu0 0.0
  %529 = vmatpush1.msra.mxu0 0.0
  %530 = vmatprep.subr.mxu0 0.0
  %531 = vmatpush1.msra.mxu0 0.0
  %532 = vmatprep.subr.mxu0 0.0
  %533 = vmatpush1.msra.mxu0 0.0
  %534 = vmatprep.subr.mxu0 0.0
  %535 = vmatpush1.msra.mxu0 0.0
  %536 = vmatprep.subr.mxu0 0.0
  %537 = vmatpush1.msra.mxu0 0.0
  %538 = vmatprep.subr.mxu0 0.0
  %539 = vmatpush1.msra.mxu0 0.0
  %540 = vmatprep.subr.mxu0 0.0
  %541 = vmatpush1.msra.mxu0 0.0
  %542 = vmatprep.subr.mxu0 0.0
  %543 = vmatpush1.msra.mxu0 0.0
  %544 = vmatprep.mubr.f32.mxu0 0.0
  %545 = vmatmul.mubr.f32.gmra.mrb[0].mxu0 %v477
  %v546 = vpop.f32.mrb[0].mxu0
  %v547 = vadd.f32 0.0, %v546
  %v548 = vpop.f32.mrb[0].mxu0
  %549 = vdwg.mxu0
  %v550 = vadd.f32 %v479, %v547
  %v551 = vtanh.pop %v550
  %s552 = scalar_lea.vmem [#allocation2], 40
  %v553 = vld [vmem:[%s552] sm:$0xff]
  %554 = vmatprep.subr.mxu0 0.0
  %555 = vmatpush1.msra.mxu0 %v167
  %556 = vmatprep.subr.mxu0 0.0
  %557 = vmatpush1.msra.mxu0 %v168
  %558 = vmatprep.subr.mxu0 0.0
  %559 = vmatpush1.msra.mxu0 %v169
  %560 = vmatprep.subr.mxu0 0.0
  %561 = vmatpush1.msra.mxu0 %v170
  %562 = vmatprep.subr.mxu0 0.0
  %563 = vmatpush1.msra.mxu0 %v171
  %564 = vmatprep.subr.mxu0 0.0
  %565 = vmatpush1.msra.mxu0 %v172
  %566 = vmatprep.subr.mxu0 0.0
  %567 = vmatpush1.msra.mxu0 %v173
  %568 = vmatprep.subr.mxu0 0.0
  %569 = vmatpush1.msra.mxu0 %v174
  %570 = vmatprep.subr.mxu0 0.0
  %571 = vmatpush1.msra.mxu0 %v175
  %572 = vmatprep.subr.mxu0 0.0
  %573 = vmatpush1.msra.mxu0 %v176
  %574 = vmatprep.subr.mxu0 0.0
  %575 = vmatpush1.msra.mxu0 %v177
  %576 = vmatprep.subr.mxu0 0.0
  %577 = vmatpush1.msra.mxu0 %v178
  %578 = vmatprep.subr.mxu0 0.0
  %579 = vmatpush1.msra.mxu0 %v179
  %580 = vmatprep.subr.mxu0 0.0
  %581 = vmatpush1.msra.mxu0 %v180
  %582 = vmatprep.subr.mxu0 0.0
  %583 = vmatpush1.msra.mxu0 %v181
  %584 = vmatprep.subr.mxu0 0.0
  %585 = vmatpush1.msra.mxu0 %v182
  %586 = vmatprep.subr.mxu0 0.0
  %587 = vmatpush1.msra.mxu0 0.0
  %588 = vmatprep.subr.mxu0 0.0
  %589 = vmatpush1.msra.mxu0 0.0
  %590 = vmatprep.subr.mxu0 0.0
  %591 = vmatpush1.msra.mxu0 0.0
  %592 = vmatprep.subr.mxu0 0.0
  %593 = vmatpush1.msra.mxu0 0.0
  %594 = vmatprep.subr.mxu0 0.0
  %595 = vmatpush1.msra.mxu0 0.0
  %596 = vmatprep.subr.mxu0 0.0
  %597 = vmatpush1.msra.mxu0 0.0
  %598 = vmatprep.subr.mxu0 0.0
  %599 = vmatpush1.msra.mxu0 0.0
  %600 = vmatprep.subr.mxu0 0.0
  %601 = vmatpush1.msra.mxu0 0.0
  %602 = vmatprep.subr.mxu0 0.0
  %603 = vmatpush1.msra.mxu0 0.0
  %604 = vmatprep.subr.mxu0 0.0
  %605 = vmatpush1.msra.mxu0 0.0
  %606 = vmatprep.subr.mxu0 0.0
  %607 = vmatpush1.msra.mxu0 0.0
  %608 = vmatprep.subr.mxu0 0.0
  %609 = vmatpush1.msra.mxu0 0.0
  %610 = vmatprep.subr.mxu0 0.0
  %611 = vmatpush1.msra.mxu0 0.0
  %612 = vmatprep.subr.mxu0 0.0
  %613 = vmatpush1.msra.mxu0 0.0
  %614 = vmatprep.subr.mxu0 0.0
  %615 = vmatpush1.msra.mxu0 0.0
  %616 = vmatprep.subr.mxu0 0.0
  %617 = vmatpush1.msra.mxu0 0.0
  %618 = vmatprep.mubr.f32.mxu0 0.0
  %619 = vmatmul.mubr.f32.gmra.mrb[0].mxu0 %v551
  %v620 = vpop.f32.mrb[0].mxu0
  %v621 = vadd.f32 0.0, %v620
  %v622 = vpop.f32.mrb[0].mxu0
  %623 = vdwg.mxu0
  %v624 = vadd.f32 %v553, %v621
  %v625 = vtanh.pop %v624
  %s626 = scalar_lea.vmem [#allocation2], 48
  %v627 = vld [vmem:[%s626] sm:$0xff]
  %628 = vmatprep.subr.mxu0 0.0
  %629 = vmatpush1.msra.mxu0 %v167
  %630 = vmatprep.subr.mxu0 0.0
  %631 = vmatpush1.msra.mxu0 %v168
  %632 = vmatprep.subr.mxu0 0.0
  %633 = vmatpush1.msra.mxu0 %v169
  %634 = vmatprep.subr.mxu0 0.0
  %635 = vmatpush1.msra.mxu0 %v170
  %636 = vmatprep.subr.mxu0 0.0
  %637 = vmatpush1.msra.mxu0 %v171
  %638 = vmatprep.subr.mxu0 0.0
  %639 = vmatpush1.msra.mxu0 %v172
  %640 = vmatprep.subr.mxu0 0.0
  %641 = vmatpush1.msra.mxu0 %v173
  %642 = vmatprep.subr.mxu0 0.0
  %643 = vmatpush1.msra.mxu0 %v174
  %644 = vmatprep.subr.mxu0 0.0
  %645 = vmatpush1.msra.mxu0 %v175
  %646 = vmatprep.subr.mxu0 0.0
  %647 = vmatpush1.msra.mxu0 %v176
  %648 = vmatprep.subr.mxu0 0.0
  %649 = vmatpush1.msra.mxu0 %v177
  %650 = vmatprep.subr.mxu0 0.0
  %651 = vmatpush1.msra.mxu0 %v178
  %652 = vmatprep.subr.mxu0 0.0
  %653 = vmatpush1.msra.mxu0 %v179
  %654 = vmatprep.subr.mxu0 0.0
  %655 = vmatpush1.msra.mxu0 %v180
  %656 = vmatprep.subr.mxu0 0.0
  %657 = vmatpush1.msra.mxu0 %v181
  %658 = vmatprep.subr.mxu0 0.0
  %659 = vmatpush1.msra.mxu0 %v182
  %660 = vmatprep.subr.mxu0 0.0
  %661 = vmatpush1.msra.mxu0 0.0
  %662 = vmatprep.subr.mxu0 0.0
  %663 = vmatpush1.msra.mxu0 0.0
  %664 = vmatprep.subr.mxu0 0.0
  %665 = vmatpush1.msra.mxu0 0.0
  %666 = vmatprep.subr.mxu0 0.0
  %667 = vmatpush1.msra.mxu0 0.0
  %668 = vmatprep.subr.mxu0 0.0
  %669 = vmatpush1.msra.mxu0 0.0
  %670 = vmatprep.subr.mxu0 0.0
  %671 = vmatpush1.msra.mxu0 0.0
  %672 = vmatprep.subr.mxu0 0.0
  %673 = vmatpush1.msra.mxu0 0.0
  %674 = vmatprep.subr.mxu0 0.0
  %675 = vmatpush1.msra.mxu0 0.0
  %676 = vmatprep.subr.mxu0 0.0
  %677 = vmatpush1.msra.mxu0 0.0
  %678 = vmatprep.subr.mxu0 0.0
  %679 = vmatpush1.msra.mxu0 0.0
  %680 = vmatprep.subr.mxu0 0.0
  %681 = vmatpush1.msra.mxu0 0.0
  %682 = vmatprep.subr.mxu0 0.0
  %683 = vmatpush1.msra.mxu0 0.0
  %684 = vmatprep.subr.mxu0 0.0
  %685 = vmatpush1.msra.mxu0 0.0
  %686 = vmatprep.subr.mxu0 0.0
  %687 = vmatpush1.msra.mxu0 0.0
  %688 = vmatprep.subr.mxu0 0.0
  %689 = vmatpush1.msra.mxu0 0.0
  %690 = vmatprep.subr.mxu0 0.0
  %691 = vmatpush1.msra.mxu0 0.0
  %692 = vmatprep.mubr.f32.mxu0 0.0
  %693 = vmatmul.mubr.f32.gmra.mrb[0].mxu0 %v625
  %v694 = vpop.f32.mrb[0].mxu0
  %v695 = vadd.f32 0.0, %v694
  %v696 = vpop.f32.mrb[0].mxu0
  %697 = vdwg.mxu0
  %v698 = vadd.f32 %v627, %v695
  %v699 = vtanh.pop %v698
  %s700 = scalar_lea.vmem [#allocation2], 56
  %v701 = vld [vmem:[%s700] sm:$0xff]
  %702 = vmatprep.subr.mxu0 0.0
  %703 = vmatpush1.msra.mxu0 %v167
  %704 = vmatprep.subr.mxu0 0.0
  %705 = vmatpush1.msra.mxu0 %v168
  %706 = vmatprep.subr.mxu0 0.0
  %707 = vmatpush1.msra.mxu0 %v169
  %708 = vmatprep.subr.mxu0 0.0
  %709 = vmatpush1.msra.mxu0 %v170
  %710 = vmatprep.subr.mxu0 0.0
  %711 = vmatpush1.msra.mxu0 %v171
  %712 = vmatprep.subr.mxu0 0.0
  %713 = vmatpush1.msra.mxu0 %v172
  %714 = vmatprep.subr.mxu0 0.0
  %715 = vmatpush1.msra.mxu0 %v173
  %716 = vmatprep.subr.mxu0 0.0
  %717 = vmatpush1.msra.mxu0 %v174
  %718 = vmatprep.subr.mxu0 0.0
  %719 = vmatpush1.msra.mxu0 %v175
  %720 = vmatprep.subr.mxu0 0.0
  %721 = vmatpush1.msra.mxu0 %v176
  %722 = vmatprep.subr.mxu0 0.0
  %723 = vmatpush1.msra.mxu0 %v177
  %724 = vmatprep.subr.mxu0 0.0
  %725 = vmatpush1.msra.mxu0 %v178
  %726 = vmatprep.subr.mxu0 0.0
  %727 = vmatpush1.msra.mxu0 %v179
  %728 = vmatprep.subr.mxu0 0.0
  %729 = vmatpush1.msra.mxu0 %v180
  %730 = vmatprep.subr.mxu0 0.0
  %731 = vmatpush1.msra.mxu0 %v181
  %732 = vmatprep.subr.mxu0 0.0
  %733 = vmatpush1.msra.mxu0 %v182
  %734 = vmatprep.subr.mxu0 0.0
  %735 = vmatpush1.msra.mxu0 0.0
  %736 = vmatprep.subr.mxu0 0.0
  %737 = vmatpush1.msra.mxu0 0.0
  %738 = vmatprep.subr.mxu0 0.0
  %739 = vmatpush1.msra.mxu0 0.0
  %740 = vmatprep.subr.mxu0 0.0
  %741 = vmatpush1.msra.mxu0 0.0
  %742 = vmatprep.subr.mxu0 0.0
  %743 = vmatpush1.msra.mxu0 0.0
  %744 = vmatprep.subr.mxu0 0.0
  %745 = vmatpush1.msra.mxu0 0.0
  %746 = vmatprep.subr.mxu0 0.0
  %747 = vmatpush1.msra.mxu0 0.0
  %748 = vmatprep.subr.mxu0 0.0
  %749 = vmatpush1.msra.mxu0 0.0
  %750 = vmatprep.subr.mxu0 0.0
  %751 = vmatpush1.msra.mxu0 0.0
  %752 = vmatprep.subr.mxu0 0.0
  %753 = vmatpush1.msra.mxu0 0.0
  %754 = vmatprep.subr.mxu0 0.0
  %755 = vmatpush1.msra.mxu0 0.0
  %756 = vmatprep.subr.mxu0 0.0
  %757 = vmatpush1.msra.mxu0 0.0
  %758 = vmatprep.subr.mxu0 0.0
  %759 = vmatpush1.msra.mxu0 0.0
  %760 = vmatprep.subr.mxu0 0.0
  %761 = vmatpush1.msra.mxu0 0.0
  %762 = vmatprep.subr.mxu0 0.0
  %763 = vmatpush1.msra.mxu0 0.0
  %764 = vmatprep.subr.mxu0 0.0
  %765 = vmatpush1.msra.mxu0 0.0
  %766 = vmatprep.mubr.f32.mxu0 0.0
  %767 = vmatmul.mubr.f32.gmra.mrb[0].mxu0 %v699
  %v768 = vpop.f32.mrb[0].mxu0
  %v769 = vadd.f32 0.0, %v768
  %v770 = vpop.f32.mrb[0].mxu0
  %771 = vdwg.mxu0
  %v772 = vadd.f32 %v701, %v769
  %v773 = vtanh.pop %v772
  %v774 = vld [vmem:[%s4] sm:$0xff]
  %v775 = vld [vmem:[%s4 + $0x8] sm:$0xff]
  %v776 = vld [vmem:[%s4 + $0x10] sm:$0xff]
  %v777 = vld [vmem:[%s4 + $0x18] sm:$0xff]
  %v778 = vld [vmem:[%s4 + $0x20] sm:$0xff]
  %v779 = vld [vmem:[%s4 + $0x28] sm:$0xff]
  %v780 = vld [vmem:[%s4 + $0x30] sm:$0xff]
  %v781 = vld [vmem:[%s4 + $0x38] sm:$0xff]
  %v782 = vld [vmem:[%s4 + $0x40] sm:$0xff]
  %v783 = vld [vmem:[%s4 + $0x48] sm:$0xff]
  %v784 = vld [vmem:[%s4 + $0x50] sm:$0xff]
  %v785 = vld [vmem:[%s4 + $0x58] sm:$0xff]
  %v786 = vld [vmem:[%s4 + $0x60] sm:$0xff]
  %v787 = vld [vmem:[%s4 + $0x68] sm:$0xff]
  %v788 = vld [vmem:[%s4 + $0x70] sm:$0xff]
  %v789 = vld [vmem:[%s4 + $0x78] sm:$0xff]
  %v790 = vld [vmem:[%s5] sm:$0x1]
  %v792 = vlaneseq
  %v793 = vshrl.u32 %v792, 7
  %v794 = vsub.s32 0, %v793
  %v795 = vrot.slane %v790, %v794
  %797 = vmatprep.subr.mxu0 0.0
  %798 = vmatpush1.msra.mxu0 %v774
  %799 = vmatprep.subr.mxu0 0.0
  %800 = vmatpush1.msra.mxu0 %v775
  %801 = vmatprep.subr.mxu0 0.0
  %802 = vmatpush1.msra.mxu0 %v776
  %803 = vmatprep.subr.mxu0 0.0
  %804 = vmatpush1.msra.mxu0 %v777
  %805 = vmatprep.subr.mxu0 0.0
  %806 = vmatpush1.msra.mxu0 %v778
  %807 = vmatprep.subr.mxu0 0.0
  %808 = vmatpush1.msra.mxu0 %v779
  %809 = vmatprep.subr.mxu0 0.0
  %810 = vmatpush1.msra.mxu0 %v780
  %811 = vmatprep.subr.mxu0 0.0
  %812 = vmatpush1.msra.mxu0 %v781
  %813 = vmatprep.subr.mxu0 0.0
  %814 = vmatpush1.msra.mxu0 %v782
  %815 = vmatprep.subr.mxu0 0.0
  %816 = vmatpush1.msra.mxu0 %v783
  %817 = vmatprep.subr.mxu0 0.0
  %818 = vmatpush1.msra.mxu0 %v784
  %819 = vmatprep.subr.mxu0 0.0
  %820 = vmatpush1.msra.mxu0 %v785
  %821 = vmatprep.subr.mxu0 0.0
  %822 = vmatpush1.msra.mxu0 %v786
  %823 = vmatprep.subr.mxu0 0.0
  %824 = vmatpush1.msra.mxu0 %v787
  %825 = vmatprep.subr.mxu0 0.0
  %826 = vmatpush1.msra.mxu0 %v788
  %827 = vmatprep.subr.mxu0 0.0
  %828 = vmatpush1.msra.mxu0 %v789
  %829 = vmatprep.subr.mxu0 0.0
  %830 = vmatpush1.msra.mxu0 0.0
  %831 = vmatprep.subr.mxu0 0.0
  %832 = vmatpush1.msra.mxu0 0.0
  %833 = vmatprep.subr.mxu0 0.0
  %834 = vmatpush1.msra.mxu0 0.0
  %835 = vmatprep.subr.mxu0 0.0
  %836 = vmatpush1.msra.mxu0 0.0
  %837 = vmatprep.subr.mxu0 0.0
  %838 = vmatpush1.msra.mxu0 0.0
  %839 = vmatprep.subr.mxu0 0.0
  %840 = vmatpush1.msra.mxu0 0.0
  %841 = vmatprep.subr.mxu0 0.0
  %842 = vmatpush1.msra.mxu0 0.0
  %843 = vmatprep.subr.mxu0 0.0
  %844 = vmatpush1.msra.mxu0 0.0
  %845 = vmatprep.subr.mxu0 0.0
  %846 = vmatpush1.msra.mxu0 0.0
  %847 = vmatprep.subr.mxu0 0.0
  %848 = vmatpush1.msra.mxu0 0.0
  %849 = vmatprep.subr.mxu0 0.0
  %850 = vmatpush1.msra.mxu0 0.0
  %851 = vmatprep.subr.mxu0 0.0
  %852 = vmatpush1.msra.mxu0 0.0
  %853 = vmatprep.subr.mxu0 0.0
  %854 = vmatpush1.msra.mxu0 0.0
  %855 = vmatprep.subr.mxu0 0.0
  %856 = vmatpush1.msra.mxu0 0.0
  %857 = vmatprep.subr.mxu0 0.0
  %858 = vmatpush1.msra.mxu0 0.0
  %859 = vmatprep.subr.mxu0 0.0
  %860 = vmatpush1.msra.mxu0 0.0
  %861 = vmatprep.mubr.f32.mxu0 0.0
  %862 = vmatmul.mubr.f32.gmra.mrb[0].mxu0 %v773
  %v863 = vpop.f32.mrb[0].mxu0
  %v864 = vadd.f32 %v795, %v863
  %v865 = vpop.f32.mrb[0].mxu0
  %866 = vdwg.mxu0
  %867 = vst [vmem:[%s6] sm:$0xff] %v864
  // Predicated region
  $region26: #{simple_rnn_forward.1} parent=0 // pred_check
    _
  $region27: #{simple_rnn_forward.1} parent=0 // pred_check_branch
    %869 = sbr.rel (0) target = $region29
  $region28: #{simple_rnn_forward.1} parent=0 // pred_region
    _
  $region29: #{simple_rnn_forward.1} parent=0 // pred_fallthru
    _
  // Predicated region
  $region30: #{simple_rnn_forward.1} parent=0 // pred_check
    _
  $region31: #{simple_rnn_forward.1} parent=0 // pred_check_branch
    %871 = sbr.rel (0) target = $region33
  $region32: #{simple_rnn_forward.1} parent=0 // pred_region
    _
  $region33: #{simple_rnn_forward.1} parent=0 // pred_fallthru
    _

</llo_original>
